<compile_context>
chip_gen: v5e
topology: v5e:2x2
jax: 0.10.0
libtpu: 0.0.40
codegen_flags: <defaults>
</compile_context>

<pallas_src>
import jax
import jax.numpy as jnp
from jax.experimental import pallas as pl
from jax.experimental.pallas import tpu as pltpu


def _round_up(x, m):
    return ((x + m - 1) // m) * m


# --------------------------------------------------------------------------
# Kernel 1: Linear classifier  (B*T, D) @ (D, KP) + (1, KP), row-tiled
# --------------------------------------------------------------------------
def _linear_kernel(x_ref, w_ref, b_ref, o_ref):
    o_ref[...] = (
        jnp.dot(x_ref[...], w_ref[...], preferred_element_type=jnp.float32)
        + b_ref[...]
    )


def classifier_forward(x, w, b):
    """x: (B, T, D), w: (K, D), b: (K,) -> logits (B, T, K) f32."""
    B, T, D = x.shape
    K = w.shape[0]
    M = B * T
    TM = min(512, _round_up(M, 8))         # row tile (>=512 rows when available)
    Mp = _round_up(M, TM)
    KP = _round_up(K, 128)                 # lane-dense output width

    x2d = jnp.pad(x.reshape(M, D).astype(jnp.float32), ((0, Mp - M), (0, 0)))
    wt = jnp.pad(w.astype(jnp.float32).T, ((0, 0), (0, KP - K)))
    b2 = jnp.pad(b.astype(jnp.float32).reshape(1, K), ((0, 0), (0, KP - K)))

    out = pl.pallas_call(
        _linear_kernel,
        out_shape=jax.ShapeDtypeStruct((Mp, KP), jnp.float32),
        grid_spec=pltpu.PrefetchScalarGridSpec(
            num_scalar_prefetch=0,
            grid=(Mp // TM,),
            in_specs=[
                pl.BlockSpec((TM, D), lambda i: (i, 0)),   # row tile of x
                pl.BlockSpec((D, KP), lambda i: (0, 0)),   # full (tiny) weight
                pl.BlockSpec((1, KP), lambda i: (0, 0)),   # bias
            ],
            out_specs=pl.BlockSpec((TM, KP), lambda i: (i, 0)),
        ),
        compiler_params=pltpu.CompilerParams(
            dimension_semantics=("parallel",),
            vmem_limit_bytes=32 * 1024 * 1024,
        ),
    )(x2d, wt, b2)
    return out[:M, :K].reshape(B, T, K)


# --------------------------------------------------------------------------
# Kernel 2: CRF negative mean log-likelihood (torchcrf semantics)
#   logits : (T, K, TB)  tags/mask : (T, TB)  valid : (1, TB)
#   start/end : (K, 1)   trans : (K, K)
#   out : (8, TB)  -- row 0 holds -llh * valid, rows 1..7 are zero.
# --------------------------------------------------------------------------
def _crf_loss_kernel(logits_ref, tags_ref, mask_ref, valid_ref,
                     start_ref, end_ref, trans_ref, out_ref):
    T, K, TB = logits_ref.shape

    logits = logits_ref[...]                       # (T, K, TB) f32
    tags = tags_ref[...]                           # (T, TB)    i32
    mask_i = mask_ref[...]                         # (T, TB)    i32
    start_col = start_ref[...]                     # (K, 1)
    end_col = end_ref[...]                         # (K, 1)
    trans = trans_ref[...]                         # (K, K)

    # ---------- numerator: gold-path score (hoisted, no per-step work) ------
    # NOTE: torchcrf requires mask[:, 0] == 1; t=0 emission is unmasked below.
    k_iota = jax.lax.broadcasted_iota(jnp.int32, (T, K, TB), 1)
    oh_tkb = (k_iota == tags[:, None, :])          # (T, K, TB) bool
    t_iota = jax.lax.broadcasted_iota(jnp.int32, (T, TB), 0)

    # emission score
    emit_tb = jnp.sum(jnp.where(oh_tkb, logits, 0.0), axis=1)        # (T, TB)
    mask_eff = jnp.logical_or(t_iota == 0, mask_i > 0)
    emit_score = jnp.sum(jnp.where(mask_eff, emit_tb, 0.0),
                         axis=0, keepdims=True)                      # (1, TB)

    # start score
    k_iota2 = jax.lax.broadcasted_iota(jnp.int32, (K, TB), 0)
    oh0 = (k_iota2 == tags[0:1, :])                                  # (K, TB)
    start_score = jnp.sum(jnp.where(oh0, start_col, 0.0),
                          axis=0, keepdims=True)                     # (1, TB)

    # transition score: one ((T-1)*TB, K) @ (K, K) matmul (no per-step MXU)
    if T > 1:
        oh_lane = (jax.lax.broadcasted_iota(jnp.int32, (T, TB, K), 2)
                   == tags[:, :, None]).astype(jnp.float32)          # (T, TB, K)
        oh_prev = oh_lane[:-1].reshape(((T - 1) * TB, K))
        tr = jnp.dot(oh_prev, trans, preferred_element_type=jnp.float32)
        tr = tr.reshape((T - 1, TB, K))
        trans_tb = jnp.sum(tr * oh_lane[1:], axis=2)                 # (T-1, TB)
        trans_score = jnp.sum(jnp.where(mask_i[1:] > 0, trans_tb, 0.0),
                              axis=0, keepdims=True)                 # (1, TB)
    else:
        trans_score = jnp.zeros((1, TB), jnp.float32)

    # end score at the last valid timestep of each sequence
    seq_ends = jnp.sum(mask_i, axis=0, keepdims=True) - 1            # (1, TB)
    last_sel = (t_iota == seq_ends)                                  # (T, TB)
    end_tb = jnp.sum(jnp.where(oh_tkb, end_col[None, :, :], 0.0), axis=1)
    end_score = jnp.sum(jnp.where(last_sel, end_tb, 0.0),
                        axis=0, keepdims=True)                       # (1, TB)

    score = start_score + emit_score + trans_score + end_score       # (1, TB)

    # ---------- denominator: forward recursion, batch on lanes --------------
    trans_kkb = jnp.broadcast_to(trans[:, :, None], (K, K, TB))      # hoisted
    alpha0 = start_col + logits[0]                                   # (K, TB)

    def body(i, alpha):
        emit = logits_ref[i]                                         # (K, TB)
        tmp = alpha[:, None, :] + trans_kkb                          # (Kj,Kk,TB)
        m = jnp.max(tmp, axis=0)                                     # (Kk, TB)
        s = jnp.sum(jnp.exp(tmp - m[None, :, :]), axis=0)            # (Kk, TB)
        alpha_new = jnp.log(s) + m + emit
        m_row = mask_ref[pl.ds(i, 1), :]                             # (1, TB)
        return jnp.where(m_row > 0, alpha_new, alpha)

    if T > 1:
        alpha = jax.lax.fori_loop(1, T, body, alpha0, unroll=4)
    else:
        alpha = alpha0

    alpha_end = alpha + end_col                                      # (K, TB)
    m3 = jnp.max(alpha_end, axis=0, keepdims=True)                   # (1, TB)
    denom = jnp.log(jnp.sum(jnp.exp(alpha_end - m3),
                            axis=0, keepdims=True)) + m3             # (1, TB)

    neg_llh = -(score - denom) * valid_ref[...]                      # (1, TB)
    row0 = jax.lax.broadcasted_iota(jnp.int32, (8, TB), 0) == 0
    out_ref[...] = jnp.where(row0, neg_llh, 0.0)


def crf_loss(logits, tags, mask, start, end, trans):
    """-mean_b( log p(tags | logits) )  (torchcrf, reduction='mean', negated)."""
    B, T, K = logits.shape
    TB = 128                                   # batch tile = lane width
    Bp = _round_up(B, TB)
    nb = Bp // TB
    pad_b = Bp - B

    logits_tkb = jnp.pad(jnp.transpose(logits.astype(jnp.float32), (1, 2, 0)),
                         ((0, 0), (0, 0), (0, pad_b)))               # (T, K, Bp)
    tags_tb = jnp.pad(jnp.transpose(tags.astype(jnp.int32), (1, 0)),
                      ((0, 0), (0, pad_b)))                          # (T, Bp)
    mask_tb = jnp.pad(jnp.transpose(mask.astype(jnp.int32), (1, 0)),
                      ((0, 0), (0, pad_b)))                          # (T, Bp)
    valid = (jnp.arange(Bp) < B).astype(jnp.float32).reshape(1, Bp)  # (1, Bp)

    out = pl.pallas_call(
        _crf_loss_kernel,
        out_shape=jax.ShapeDtypeStruct((8 * nb, TB), jnp.float32),
        grid_spec=pltpu.PrefetchScalarGridSpec(
            num_scalar_prefetch=0,
            grid=(nb,),
            in_specs=[
                pl.BlockSpec((T, K, TB), lambda b: (0, 0, b)),
                pl.BlockSpec((T, TB), lambda b: (0, b)),
                pl.BlockSpec((T, TB), lambda b: (0, b)),
                pl.BlockSpec((1, TB), lambda b: (0, b)),
                pl.BlockSpec((K, 1), lambda b: (0, 0)),
                pl.BlockSpec((K, 1), lambda b: (0, 0)),
                pl.BlockSpec((K, K), lambda b: (0, 0)),
            ],
            out_specs=pl.BlockSpec((8, TB), lambda b: (b, 0)),
        ),
        compiler_params=pltpu.CompilerParams(
            dimension_semantics=("parallel",),
            vmem_limit_bytes=32 * 1024 * 1024,
        ),
    )(logits_tkb, tags_tb, mask_tb, valid,
      start.astype(jnp.float32).reshape(K, 1),
      end.astype(jnp.float32).reshape(K, 1),
      trans.astype(jnp.float32))
    return jnp.sum(out) / jnp.float32(B)


# --------------------------------------------------------------------------
# CRFLayer forward (glue): returns (slot_loss, slot_logits)
# --------------------------------------------------------------------------
def crf_layer_forward(params, sequence_output, attention_mask, labels):
    logits = classifier_forward(sequence_output, params["w"], params["b"])
    loss = crf_loss(logits, labels, attention_mask,
                    params["start"], params["end"], params["trans"])
    return loss, logits


# --------------------------------------------------------------------------
# Pure-JAX reference (torchcrf semantics) for verification
# --------------------------------------------------------------------------
def crf_layer_reference(params, x, mask, tags):
    logits = jnp.einsum("btd,kd->btk", x, params["w"]) + params["b"]
    B, T, K = logits.shape
    start, end, trans = params["start"], params["end"], params["trans"]
    maskf = mask.astype(jnp.float32)

    # numerator
    score = start[tags[:, 0]] + logits[jnp.arange(B), 0, tags[:, 0]]
    for i in range(1, T):
        score = score + (trans[tags[:, i - 1], tags[:, i]]
                         + logits[jnp.arange(B), i, tags[:, i]]) * maskf[:, i]
    seq_ends = jnp.sum(mask, axis=1) - 1
    last_tags = tags[jnp.arange(B), seq_ends]
    score = score + end[last_tags]

    # denominator
    alpha = start[None, :] + logits[:, 0, :]
    for i in range(1, T):
        nxt = jax.scipy.special.logsumexp(
            alpha[:, :, None] + trans[None, :, :], axis=1) + logits[:, i, :]
        alpha = jnp.where(mask[:, i:i + 1] > 0, nxt, alpha)
    denom = jax.scipy.special.logsumexp(alpha + end[None, :], axis=1)

    llh = score - denom
    return -jnp.mean(llh), logits


# --------------------------------------------------------------------------
if __name__ == "__main__":
    B, T, H, K = 2, 8, 32, 8          # batch, seq, hidden_dim, num_labels
    D = 2 * H                         # classifier input dim (2 * hidden_dim)

    key = jax.random.PRNGKey(0)
    k1, k2, k3, k4, k5, k6, k7 = jax.random.split(key, 7)

    params = {
        "w": (jax.random.normal(k1, (K, D), jnp.float32) * 0.1),   # Linear weight (K, D)
        "b": (jax.random.normal(k2, (K,), jnp.float32) * 0.1),     # Linear bias
        "start": jax.random.uniform(k3, (K,), jnp.float32, -0.1, 0.1),
        "end": jax.random.uniform(k4, (K,), jnp.float32, -0.1, 0.1),
        "trans": jax.random.uniform(k5, (K, K), jnp.float32, -0.1, 0.1),
    }

    sequence_output = jax.random.normal(k6, (B, T, D), jnp.float32)
    labels = jax.random.randint(k7, (B, T), 0, K, jnp.int32)
    lengths = jnp.array([T, 5], jnp.int32)                     # variable lengths
    attention_mask = (jnp.arange(T)[None, :] < lengths[:, None]).astype(jnp.int32)

    loss, logits = crf_layer_forward(params, sequence_output, attention_mask, labels)
    loss = jax.block_until_ready(loss)
    logits = jax.block_until_ready(logits)

    ref_loss, ref_logits = crf_layer_reference(params, sequence_output,
                                               attention_mask, labels)
    assert jnp.allclose(logits, ref_logits, atol=1e-4, rtol=1e-4), \
        f"logits mismatch: max |d| = {jnp.max(jnp.abs(logits - ref_logits))}"
    assert jnp.allclose(loss, ref_loss, atol=2e-4, rtol=2e-4), \
        f"loss mismatch: {loss} vs {ref_loss}"

    print("KERNEL_OK")
</pallas_src>

<mosaic_0001>
module attributes {stable_mosaic.version = 11 : i64} {
  func.func @_linear_kernel(%arg0: i32, %arg1: memref<16x64xf32, #tpu.memory_space<vmem>>, %arg2: memref<64x128xf32, #tpu.memory_space<vmem>>, %arg3: memref<1x128xf32, #tpu.memory_space<vmem>>, %arg4: memref<16x128xf32, #tpu.memory_space<vmem>>) attributes {dimension_semantics = [#tpu.dimension_semantics<parallel>], iteration_bounds = array<i64: 1>, scalar_prefetch = 0 : i64, scratch_operands = 0 : i64, tpu.core_type = #tpu.core_type<tc>, window_params = [{transform_indices = @transform_0, window_bounds = array<i64: 16, 64>}, {pipeline_mode = #tpu.pipeline_mode<synchronous>, transform_indices = @transform_1, window_bounds = array<i64: 64, 128>}, {pipeline_mode = #tpu.pipeline_mode<synchronous>, transform_indices = @transform_2, window_bounds = array<i64: 1, 128>}, {transform_indices = @transform_3, window_bounds = array<i64: 16, 128>}]} {
    %c0 = arith.constant 0 : index
    %c0_0 = arith.constant 0 : index
    %0 = vector.load %arg1[%c0, %c0_0] : memref<16x64xf32, #tpu.memory_space<vmem>>, vector<16x64xf32>
    %c0_1 = arith.constant 0 : index
    %c0_2 = arith.constant 0 : index
    %1 = vector.load %arg2[%c0_1, %c0_2] : memref<64x128xf32, #tpu.memory_space<vmem>>, vector<64x128xf32>
    %cst = arith.constant dense<0.000000e+00> : vector<16x128xf32>
    %2 = tpu.matmul %0, %1, %cst {dimension_numbers = #tpu.dot_dimension_numbers<[1], [0], [0], [1], [0, 0, 1, 1], [], []>} : vector<16x64xf32>, vector<64x128xf32>, vector<16x128xf32> -> vector<16x128xf32>
    %c0_3 = arith.constant 0 : index
    %c0_4 = arith.constant 0 : index
    %3 = vector.load %arg3[%c0_3, %c0_4] : memref<1x128xf32, #tpu.memory_space<vmem>>, vector<1x128xf32>
    %4 = vector.broadcast %3 : vector<1x128xf32> to vector<16x128xf32>
    %5 = arith.addf %2, %4 : vector<16x128xf32>
    %c0_5 = arith.constant 0 : index
    %c0_6 = arith.constant 0 : index
    %6 = vector.load %arg4[%c0_5, %c0_6] : memref<16x128xf32, #tpu.memory_space<vmem>>, vector<16x128xf32>
    tpu.vector_store %arg4[%c0_5, %c0_6], %5 {strides = array<i32>} : memref<16x128xf32, #tpu.memory_space<vmem>>, vector<16x128xf32>,
    return
  }
  func.func @transform_0(%arg0: i32) -> (i32, i32) {
    %c0_i32 = arith.constant 0 : i32
    %c0_i32_0 = arith.constant 0 : i32
    return %arg0, %c0_i32 : i32, i32
  }
  func.func @transform_1(%arg0: i32) -> (i32, i32) {
    %c0_i32 = arith.constant 0 : i32
    %c0_i32_0 = arith.constant 0 : i32
    %c0_i32_1 = arith.constant 0 : i32
    return %c0_i32, %c0_i32_0 : i32, i32
  }
  func.func @transform_2(%arg0: i32) -> (i32, i32) {
    %c0_i32 = arith.constant 0 : i32
    %c0_i32_0 = arith.constant 0 : i32
    %c0_i32_1 = arith.constant 0 : i32
    return %c0_i32, %c0_i32_0 : i32, i32
  }
  func.func @transform_3(%arg0: i32) -> (i32, i32) {
    %c0_i32 = arith.constant 0 : i32
    %c0_i32_0 = arith.constant 0 : i32
    return %arg0, %c0_i32 : i32, i32
  }
}

</mosaic_0001>

<llo_original>
// kernel: tpu_custom_call.1
$region0: #{tpu_custom_call.1}
  #allocation0 [shape = 'u32[]', space=smem, size = 0x4, offset = 0x4, fixed_abs, tag = 'smem constant byte address 0x4 - core index']
  #allocation1 [shape = 'u32[72,128]{1,0:T(1,128)}', space=vmem, size = 0x9000, scoped, tag = 'internal scratch']
  %s0 = inlined_call_operand.hbm [shape: f32[16,64], index: 0, kind: input, shape index: {}]
  %s1 = inlined_call_operand.hbm [shape: f32[64,128], index: 1, kind: input, shape index: {}]
  %s2 = inlined_call_operand.vmem [shape: f32[1,128], index: 2, kind: input, shape index: {}]
  %s3 = inlined_call_operand.hbm [shape: f32[16,128], index: 3, kind: output, shape index: {}]
  %s4 = sld [smem:[#allocation0]]
  $region30: #{tpu_custom_call.1} parent=0
    _
  %s6 = ssub.s32 1, %s4
  %s7 = scalar_select 0, %s6, %s4
  $region1: #{tpu_custom_call.1} parent=0
    #allocation2 [shape = 'u8[8192]{0}', space=vmem, size = 0x2000, scoped, tag = 'input window, operand 0, single buffered']
    #allocation3 [shape = 's32[1]{0}', space=sflag, size = 0x4, scoped, tag = 'scoped memory for tpu_custom_call.1']
    #allocation4 [shape = 's32[1]{0}', space=sflag, size = 0x4, scoped, tag = 'scoped memory for tpu_custom_call.1']
    #allocation5 [shape = 'u8[32768]{0}', space=vmem, size = 0x8000, scoped, tag = 'input window, operand 1, single buffered']
    #allocation6 [shape = 's32[1]{0}', space=sflag, size = 0x4, scoped, tag = 'scoped memory for tpu_custom_call.1']
    #allocation7 [shape = 'u8[8192]{0}', space=vmem, size = 0x2000, scoped, tag = 'output window, operand 0, single buffered']
    %8 = vsyncpa [#allocation3], 0
    %9 = vsyncpa [#allocation6], 0
    %10 = vsyncpa [#allocation4], 0
    // Predicated region
    $region2: #{tpu_custom_call.1} parent=1 // pred_check
      _
    $region3: #{tpu_custom_call.1} parent=1 // pred_check_branch
      %12 = sbr.rel (0) target = $region5
    $region4: #{tpu_custom_call.1} parent=1 // pred_region
      %14 = vsyncadd [#allocation3], 0
      %s15 = sshll.u32 %s0, 4
      %s16 = int_to_ptr.hbm [resolvable:$true] %s15
      %s17 = sshll.u32 [#allocation2], 4
      %s18 = int_to_ptr.vmem [resolvable:$true] %s17
      %23 = dma.hbm_to_vmem [thread:$0]  %s16, 256, %s18, [#allocation3], 128, 128, 8
    $region5: #{tpu_custom_call.1} parent=1 // pred_fallthru
      _
    // Predicated region
    $region6: #{tpu_custom_call.1} parent=1 // pred_check
      _
    $region7: #{tpu_custom_call.1} parent=1 // pred_check_branch
      %25 = sbr.rel (0) target = $region9
    $region8: #{tpu_custom_call.1} parent=1 // pred_region
      %27 = vsyncadd [#allocation6], 0
      %s28 = sshll.u32 %s1, 4
      %s29 = int_to_ptr.hbm [resolvable:$true] %s28
      %s30 = sshll.u32 [#allocation5], 4
      %s31 = int_to_ptr.vmem [resolvable:$true] %s30
      %36 = dma.hbm_to_vmem [thread:$0]  %s29, 1024, %s31, [#allocation6], 128, 128, 8
    $region9: #{tpu_custom_call.1} parent=1 // pred_fallthru
      _
    // Predicated region
    $region10: #{tpu_custom_call.1} parent=1 // pred_check
      _
    $region11: #{tpu_custom_call.1} parent=1 // pred_check_branch
      %38 = sbr.rel (0) target = $region13
    $region12: #{tpu_custom_call.1} parent=1 // pred_region
      _
    $region13: #{tpu_custom_call.1} parent=1 // pred_fallthru
      _
    // Predicated region
    $region14: #{tpu_custom_call.1} parent=1 // pred_check
      _
    $region15: #{tpu_custom_call.1} parent=1 // pred_check_branch
      %40 = sbr.rel (0) target = $region17
    $region16: #{tpu_custom_call.1} parent=1 // pred_region
      %42 = dma.done [#allocation3], 256
    $region17: #{tpu_custom_call.1} parent=1 // pred_fallthru
      _
    // Predicated region
    $region18: #{tpu_custom_call.1} parent=1 // pred_check
      _
    $region19: #{tpu_custom_call.1} parent=1 // pred_check_branch
      %44 = sbr.rel (0) target = $region21
    $region20: #{tpu_custom_call.1} parent=1 // pred_region
      %46 = dma.done [#allocation6], 1024
    $region21: #{tpu_custom_call.1} parent=1 // pred_fallthru
      _
    %v47 = vld [vmem:[#allocation2] sm:$0xff]
    %v48 = vld [vmem:[#allocation2 + $0x8] sm:$0xff]
    %v49 = vld [vmem:[#allocation5] sm:$0xff]
    %v50 = vld [vmem:[#allocation5 + $0x8] sm:$0xff]
    %v51 = vld [vmem:[#allocation5 + $0x10] sm:$0xff]
    %v52 = vld [vmem:[#allocation5 + $0x18] sm:$0xff]
    %v53 = vld [vmem:[#allocation5 + $0x20] sm:$0xff]
    %v54 = vld [vmem:[#allocation5 + $0x28] sm:$0xff]
    %v55 = vld [vmem:[#allocation5 + $0x30] sm:$0xff]
    %v56 = vld [vmem:[#allocation5 + $0x38] sm:$0xff]
    %v57 = vld [vmem:[%s2] sm:$0x1]
    %v59 = vperm.slane %v57, 0
    %vm61 = vcmask 523264
    %v63 = vsel %vm61, %v47, 0
    %v66 = vsel %vm61, %v48, 0
    %68 = vmatpush.msra.mxu0 0.0
    %69 = vmatpush.msra.mxu0 0.0
    %70 = vmatpush.msra.mxu0 0.0
    %71 = vmatpush.msra.mxu0 0.0
    %72 = vmatpush.msra.mxu0 0.0
    %73 = vmatpush.msra.mxu0 0.0
    %74 = vmatpush.msra.mxu0 0.0
    %75 = vmatpush.msra.mxu0 0.0
    %76 = vmatpush.msra.mxu0 %v56
    %77 = vmatpush.msra.mxu0 %v55
    %78 = vmatpush.msra.mxu0 %v54
    %79 = vmatpush.msra.mxu0 %v53
    %80 = vmatpush.msra.mxu0 %v52
    %81 = vmatpush.msra.mxu0 %v51
    %82 = vmatpush.msra.mxu0 %v50
    %83 = vmatpush.msra.mxu0 %v49
    %84 = vmatmul.f32.gmra.mxu0 %v63
    %v85 = vpop.f32.mrf.mxu0
    %v86 = vadd.f32 %v59, %v85
    %87 = vmatmul.f32.gmra.mxu0 %v66
    %v88 = vpop.f32.mrf.mxu0
    %v89 = vadd.f32 %v59, %v88
    %90 = vdwg.mxu0
    %91 = vst [vmem:[#allocation7] sm:$0xff] %v86
    %92 = vst [vmem:[#allocation7 + $0x8] sm:$0xff] %v89
    // Predicated region
    $region22: #{tpu_custom_call.1} parent=1 // pred_check
      _
    $region23: #{tpu_custom_call.1} parent=1 // pred_check_branch
      %94 = sbr.rel (0) target = $region25
    $region24: #{tpu_custom_call.1} parent=1 // pred_region
      %96 = vsyncadd [#allocation4], 0
      %s97 = sshll.u32 [#allocation7], 4
      %s98 = int_to_ptr.vmem [resolvable:$true] %s97
      %s99 = sshll.u32 %s3, 4
      %s100 = int_to_ptr.hbm [resolvable:$true] %s99
      %105 = dma.vmem_to_hbm [thread:$0]  %s98, 256, %s100, [#allocation4], 128, 128, 8
    $region25: #{tpu_custom_call.1} parent=1 // pred_fallthru
      _
    // Predicated region
    $region26: #{tpu_custom_call.1} parent=1 // pred_check
      _
    $region27: #{tpu_custom_call.1} parent=1 // pred_check_branch
      %107 = sbr.rel (0) target = $region29
    $region28: #{tpu_custom_call.1} parent=1 // pred_region
      %109 = dma.done [#allocation4], 256
    $region29: #{tpu_custom_call.1} parent=1 // pred_fallthru
      _
    %110 = vsyncpa [#allocation3], 1
    %111 = vsyncpa [#allocation6], 1
    %112 = vsyncpa [#allocation4], 1

</llo_original>
